<compile_context>
chip_gen: v5e
topology: v5e:2x2
jax: 0.10.0
libtpu: 0.0.40
codegen_flags: <defaults>
</compile_context>

<pallas_src>
import functools

import jax
import jax.numpy as jnp
from jax.experimental import pallas as pl
from jax.experimental.pallas import tpu as pltpu


_VMEM_LIMIT = 48 * 1024 * 1024    # generation-safe cap (v7x has 64 MiB physical)
_VMEM_BUDGET = 40 * 1024 * 1024   # tile-selection budget (leave pipeline headroom)


def _round_up(v, m):
    return ((v + m - 1) // m) * m


def _next_pow2(v):
    return 1 if v <= 1 else 1 << (v - 1).bit_length()


def _pad2d(x, rows, cols):
    r, c = x.shape
    if r == rows and c == cols:
        return x
    return jnp.pad(x, ((0, rows - r), (0, cols - c)))


def _est_vmem(tm, tk, fp, cp=128):
    """Rough pipelined-VMEM footprint of one fused layer (bytes)."""
    return (2 * tm * tk * 2      # A tiles, double-buffered bf16
            + 2 * tk * fp * 2    # X slabs, double-buffered bf16
            + 2 * fp * cp * 2    # W (conservatively counted x2)
            + 2 * tm * cp * 2    # output tiles
            + tm * cp * 4)       # f32 accumulator scratch


# --------------------------- fused GCN layer kernel -------------------------

def _gcn_layer_kernel(a_ref, x_ref, w_ref, o_ref, acc_ref, *, activation):
    """One (tm, tn) output tile of act(A @ (X @ W)), accumulated over K tiles."""
    k = pl.program_id(2)

    @pl.when(k == 0)
    def _():
        acc_ref[...] = jnp.zeros_like(acc_ref)

    # Feature transform for this K slab: (tk, Fp) @ (Fp, tn) -> (tk, tn).
    # Small MXU work that hides under the HBM-bound A-tile DMA.
    s = jnp.dot(x_ref[...], w_ref[...], preferred_element_type=jnp.float32)

    # Propagation: (tm, tk) @ (tk, tn), f32 accumulation.
    acc_ref[...] += jnp.dot(a_ref[...], s.astype(a_ref.dtype),
                            preferred_element_type=jnp.float32)

    @pl.when(k == pl.num_programs(2) - 1)
    def _():
        acc = acc_ref[...]
        if activation == "relu":
            acc = jnp.maximum(acc, 0.0)
        o_ref[...] = acc.astype(o_ref.dtype)


def _gcn_layer(a_p, x_p, w_p, *, tm, tk, activation, out_dtype):
    """out_p = act(a_p @ (x_p @ w_p)), all operands already padded & bf16."""
    np_, np_k = a_p.shape
    assert np_ == np_k
    np_x, fp = x_p.shape
    fp_w, cp = w_p.shape
    assert np_x == np_ and fp_w == fp
    assert np_ % tm == 0 and np_ % tk == 0 and cp % 128 == 0 and fp % 128 == 0

    tn = 128
    grid = (np_ // tm, cp // tn, np_ // tk)
    n_i = np_ // tm

    # Padded-dim cost estimate (A read once; X slab re-read per row tile).
    cost = pl.CostEstimate(
        flops=2 * np_ * np_ * cp + n_i * 2 * np_ * fp * cp,
        transcendentals=0,
        bytes_accessed=(np_ * np_ * 2
                        + n_i * np_ * fp * 2
                        + fp * cp * 2
                        + np_ * cp * jnp.dtype(out_dtype).itemsize),
    )

    return pl.pallas_call(
        functools.partial(_gcn_layer_kernel, activation=activation),
        out_shape=jax.ShapeDtypeStruct((np_, cp), out_dtype),
        grid_spec=pltpu.PrefetchScalarGridSpec(
            num_scalar_prefetch=0,
            grid=grid,
            in_specs=[
                pl.BlockSpec((tm, tk), lambda i, j, k: (i, k)),   # A tile
                pl.BlockSpec((tk, fp), lambda i, j, k: (k, 0)),   # X slab (full width)
                pl.BlockSpec((fp, tn), lambda i, j, k: (0, j)),   # W, resident
            ],
            out_specs=pl.BlockSpec((tm, tn), lambda i, j, k: (i, j)),
            scratch_shapes=[pltpu.VMEM((tm, tn), jnp.float32)],
        ),
        compiler_params=pltpu.CompilerParams(
            dimension_semantics=("parallel", "parallel", "arbitrary"),
            vmem_limit_bytes=_VMEM_LIMIT,
        ),
        cost_estimate=cost,
    )(a_p, x_p, w_p)


# ------------------------------ GCN forward ---------------------------------

def gcn_forward(x, a_norm, w1, w2):
    """2-layer GCN forward. bf16 MXU feeds, f32 accumulation."""
    n, nfeat = x.shape
    nhid = w1.shape[1]
    nclass = w2.shape[1]
    assert a_norm.shape == (n, n)
    assert w1.shape == (nfeat, nhid)
    assert w2.shape == (nhid, nclass)

    f1p = _round_up(nfeat, 128)
    hp = _round_up(nhid, 128)
    cp = _round_up(nclass, 128)
    fmax = max(f1p, hp)

    # --- tile selection: powers of two so that tm | tk | Np (single padding
    #     scheme for the whole forward -> intermediates stay padded) ---------
    tk = min(1024, max(128, _next_pow2(n)))
    while tk > 128 and _est_vmem(min(512, tk), tk, fmax) > _VMEM_BUDGET:
        tk //= 2
    # >= 2 row tiles on the "parallel" i axis (v7x dual-TC), multiple of 16.
    tm = min(512, max(16, _next_pow2(-(-n // 2))))
    tm = min(tm, tk)
    np_ = _round_up(n, tk)

    # --- one-shot padding to lane-dense bf16; no slice/re-pad between layers -
    a_p = _pad2d(a_norm.astype(jnp.bfloat16), np_, np_)
    x_p = _pad2d(x.astype(jnp.bfloat16), np_, f1p)
    w1_p = _pad2d(w1.astype(jnp.bfloat16), f1p, hp)
    w2_p = _pad2d(w2.astype(jnp.bfloat16), hp, cp)

    # Layer 1 (fused): H = relu(A @ (X @ W1)), kept padded bf16 in HBM.
    h_p = _gcn_layer(a_p, x_p, w1_p, tm=tm, tk=tk,
                     activation="relu", out_dtype=jnp.bfloat16)

    # TODO(synk): F.dropout(h, training=self.training) — eval mode assumed,
    # dropout is the identity here.

    # Layer 2 (fused): out = A @ (H @ W2); bf16 store path (16x lane-padded).
    out_p = _gcn_layer(a_p, h_p, w2_p, tm=tm, tk=tk,
                       activation=None, out_dtype=jnp.bfloat16)

    return out_p[:n, :nclass].astype(jnp.float32)


# ----------------------------- glue / reference -----------------------------

def normalize_adj(a):
    """A_norm = D^{-1/2} (A + I) D^{-1/2}  (plain JAX, matches PyTorch ref)."""
    n = a.shape[0]
    a_hat = a + jnp.eye(n, dtype=a.dtype)
    d = jnp.sum(a_hat, axis=1)
    d_inv_sqrt = jnp.power(d, -0.5)
    return (d_inv_sqrt[:, None] * a_hat) * d_inv_sqrt[None, :]


def xavier_uniform(key, fan_in, fan_out, dtype=jnp.float32):
    limit = (6.0 / (fan_in + fan_out)) ** 0.5
    return jax.random.uniform(key, (fan_in, fan_out), dtype,
                              minval=-limit, maxval=limit)


def gcn_reference_bf16(x, a_norm, w1, w2):
    """Pure-JAX reference mirroring the kernel's bf16-in / f32-acc numerics."""
    xb = x.astype(jnp.bfloat16)
    ab = a_norm.astype(jnp.bfloat16)
    w1b = w1.astype(jnp.bfloat16)
    w2b = w2.astype(jnp.bfloat16)
    s1 = jnp.dot(xb, w1b, preferred_element_type=jnp.float32).astype(jnp.bfloat16)
    h = jnp.maximum(
        jnp.dot(ab, s1, preferred_element_type=jnp.float32), 0.0
    ).astype(jnp.bfloat16)
    s2 = jnp.dot(h, w2b, preferred_element_type=jnp.float32).astype(jnp.bfloat16)
    out = jnp.dot(ab, s2, preferred_element_type=jnp.float32).astype(jnp.bfloat16)
    return out.astype(jnp.float32)


if __name__ == "__main__":
    # Small shapes consistent with the module: N nodes, nfeat -> nhid -> nclass
    N, NFEAT, NHID, NCLASS = 32, 16, 32, 8

    key = jax.random.PRNGKey(0)
    k_x, k_a, k_w1, k_w2 = jax.random.split(key, 4)

    x = jax.random.normal(k_x, (N, NFEAT), dtype=jnp.float32)

    # Random symmetric binary adjacency (no self loops; normalize_adj adds I)
    a_raw = (jax.random.uniform(k_a, (N, N)) > 0.7).astype(jnp.float32)
    a_sym = jnp.clip(a_raw + a_raw.T, 0.0, 1.0)
    a_sym = a_sym * (1.0 - jnp.eye(N, dtype=jnp.float32))
    a_norm = normalize_adj(a_sym)

    w1 = xavier_uniform(k_w1, NFEAT, NHID)
    w2 = xavier_uniform(k_w2, NHID, NCLASS)

    out = jax.jit(gcn_forward)(x, a_norm, w1, w2)
    out = jax.block_until_ready(out)

    ref = gcn_reference_bf16(x, a_norm, w1, w2)
    assert out.shape == (N, NCLASS)
    assert jnp.allclose(out, ref, atol=2e-2, rtol=2e-2), "mismatch vs reference"

    print("KERNEL_OK")
</pallas_src>

<mosaic_0001>
module attributes {stable_mosaic.version = 11 : i64} {
  func.func @_gcn_layer_kernel(%arg0: i32, %arg1: i32, %arg2: i32, %arg3: memref<16x128xbf16, #tpu.memory_space<vmem>>, %arg4: memref<128x128xbf16, #tpu.memory_space<vmem>>, %arg5: memref<128x128xbf16, #tpu.memory_space<vmem>>, %arg6: memref<16x128xbf16, #tpu.memory_space<vmem>>, %arg7: memref<16x128xf32, #tpu.memory_space<vmem>>) attributes {dimension_semantics = [#tpu.dimension_semantics<parallel>, #tpu.dimension_semantics<parallel>, #tpu.dimension_semantics<arbitrary>], iteration_bounds = array<i64: 8, 1, 1>, scalar_prefetch = 0 : i64, scratch_operands = 1 : i64, tpu.core_type = #tpu.core_type<tc>, window_params = [{transform_indices = @transform_0, window_bounds = array<i64: 16, 128>}, {transform_indices = @transform_1, window_bounds = array<i64: 128, 128>}, {transform_indices = @transform_2, window_bounds = array<i64: 128, 128>}, {transform_indices = @transform_3, window_bounds = array<i64: 16, 128>}]} {
    %c0_i32 = arith.constant 0 : i32
    %0 = arith.cmpi eq, %arg2, %c0_i32 : i32
    %1 = arith.extui %0 : i1 to i32
    %c0_i32_0 = arith.constant 0 : i32
    %2 = arith.cmpi ne, %1, %c0_i32_0 : i32
    scf.if %2 {
      %cst_13 = arith.constant 0.000000e+00 : f32
      %15 = vector.broadcast %cst_13 : f32 to vector<16x128xf32>
      %c0_14 = arith.constant 0 : index
      %c0_15 = arith.constant 0 : index
      %16 = vector.load %arg7[%c0_14, %c0_15] : memref<16x128xf32, #tpu.memory_space<vmem>>, vector<16x128xf32>
      tpu.vector_store %arg7[%c0_14, %c0_15], %15 {strides = array<i32>} : memref<16x128xf32, #tpu.memory_space<vmem>>, vector<16x128xf32>,
    } else {
    }
    %c0 = arith.constant 0 : index
    %c0_1 = arith.constant 0 : index
    %3 = vector.load %arg4[%c0, %c0_1] : memref<128x128xbf16, #tpu.memory_space<vmem>>, vector<128x128xbf16>
    %c0_2 = arith.constant 0 : index
    %c0_3 = arith.constant 0 : index
    %4 = vector.load %arg5[%c0_2, %c0_3] : memref<128x128xbf16, #tpu.memory_space<vmem>>, vector<128x128xbf16>
    %cst = arith.constant dense<0.000000e+00> : vector<128x128xf32>
    %5 = tpu.matmul %3, %4, %cst {dimension_numbers = #tpu.dot_dimension_numbers<[1], [0], [0], [1], [0, 0, 1, 1], [], []>} : vector<128x128xbf16>, vector<128x128xbf16>, vector<128x128xf32> -> vector<128x128xf32>
    %c0_4 = arith.constant 0 : index
    %c0_5 = arith.constant 0 : index
    %6 = vector.load %arg7[%c0_4, %c0_5] : memref<16x128xf32, #tpu.memory_space<vmem>>, vector<16x128xf32>
    %c0_6 = arith.constant 0 : index
    %c0_7 = arith.constant 0 : index
    %7 = vector.load %arg3[%c0_6, %c0_7] : memref<16x128xbf16, #tpu.memory_space<vmem>>, vector<16x128xbf16>
    %8 = arith.truncf %5 : vector<128x128xf32> to vector<128x128xbf16>
    %cst_8 = arith.constant dense<0.000000e+00> : vector<16x128xf32>
    %9 = tpu.matmul %7, %8, %cst_8 {dimension_numbers = #tpu.dot_dimension_numbers<[1], [0], [0], [1], [0, 0, 1, 1], [], []>} : vector<16x128xbf16>, vector<128x128xbf16>, vector<16x128xf32> -> vector<16x128xf32>
    %10 = arith.addf %6, %9 : vector<16x128xf32>
    %c0_9 = arith.constant 0 : index
    %c0_10 = arith.constant 0 : index
    %11 = vector.load %arg7[%c0_9, %c0_10] : memref<16x128xf32, #tpu.memory_space<vmem>>, vector<16x128xf32>
    tpu.vector_store %arg7[%c0_9, %c0_10], %10 {strides = array<i32>} : memref<16x128xf32, #tpu.memory_space<vmem>>, vector<16x128xf32>,
    %c0_i32_11 = arith.constant 0 : i32
    %12 = arith.cmpi eq, %arg2, %c0_i32_11 : i32
    %13 = arith.extui %12 : i1 to i32
    %c0_i32_12 = arith.constant 0 : i32
    %14 = arith.cmpi ne, %13, %c0_i32_12 : i32
    scf.if %14 {
      %c0_13 = arith.constant 0 : index
      %c0_14 = arith.constant 0 : index
      %15 = vector.load %arg7[%c0_13, %c0_14] : memref<16x128xf32, #tpu.memory_space<vmem>>, vector<16x128xf32>
      %cst_15 = arith.constant 0.000000e+00 : f32
      %16 = vector.broadcast %cst_15 : f32 to vector<16x128xf32>
      %17 = arith.maximumf %15, %16 : vector<16x128xf32>
      %18 = arith.truncf %17 : vector<16x128xf32> to vector<16x128xbf16>
      %c0_16 = arith.constant 0 : index
      %c0_17 = arith.constant 0 : index
      %19 = vector.load %arg6[%c0_16, %c0_17] : memref<16x128xbf16, #tpu.memory_space<vmem>>, vector<16x128xbf16>
      tpu.vector_store %arg6[%c0_16, %c0_17], %18 {strides = array<i32>} : memref<16x128xbf16, #tpu.memory_space<vmem>>, vector<16x128xbf16>,
    } else {
    }
    return
  }
  func.func @transform_0(%arg0: i32, %arg1: i32, %arg2: i32) -> (i32, i32) {
    %c0_i32 = arith.constant 0 : i32
    return %arg0, %arg2 : i32, i32
  }
  func.func @transform_1(%arg0: i32, %arg1: i32, %arg2: i32) -> (i32, i32) {
    %c0_i32 = arith.constant 0 : i32
    %c0_i32_0 = arith.constant 0 : i32
    return %arg2, %c0_i32 : i32, i32
  }
  func.func @transform_2(%arg0: i32, %arg1: i32, %arg2: i32) -> (i32, i32) {
    %c0_i32 = arith.constant 0 : i32
    %c0_i32_0 = arith.constant 0 : i32
    return %c0_i32, %arg1 : i32, i32
  }
  func.func @transform_3(%arg0: i32, %arg1: i32, %arg2: i32) -> (i32, i32) {
    %c0_i32 = arith.constant 0 : i32
    return %arg0, %arg1 : i32, i32
  }
}

module attributes {stable_mosaic.version = 11 : i64} {
  func.func @_gcn_layer_kernel(%arg0: i32, %arg1: i32, %arg2: i32, %arg3: memref<16x128xbf16, #tpu.memory_space<vmem>>, %arg4: memref<128x128xbf16, #tpu.memory_space<vmem>>, %arg5: memref<128x128xbf16, #tpu.memory_space<vmem>>, %arg6: memref<16x128xbf16, #tpu.memory_space<vmem>>, %arg7: memref<16x128xf32, #tpu.memory_space<vmem>>) attributes {dimension_semantics = [#tpu.dimension_semantics<parallel>, #tpu.dimension_semantics<parallel>, #tpu.dimension_semantics<arbitrary>], iteration_bounds = array<i64: 8, 1, 1>, scalar_prefetch = 0 : i64, scratch_operands = 1 : i64, tpu.core_type = #tpu.core_type<tc>, window_params = [{transform_indices = @transform_0, window_bounds = array<i64: 16, 128>}, {transform_indices = @transform_1, window_bounds = array<i64: 128, 128>}, {transform_indices = @transform_2, window_bounds = array<i64: 128, 128>}, {transform_indices = @transform_3, window_bounds = array<i64: 16, 128>}]} {
    %c0_i32 = arith.constant 0 : i32
    %0 = arith.cmpi eq, %arg2, %c0_i32 : i32
    %1 = arith.extui %0 : i1 to i32
    %c0_i32_0 = arith.constant 0 : i32
    %2 = arith.cmpi ne, %1, %c0_i32_0 : i32
    scf.if %2 {
      %cst_13 = arith.constant 0.000000e+00 : f32
      %15 = vector.broadcast %cst_13 : f32 to vector<16x128xf32>
      %c0_14 = arith.constant 0 : index
      %c0_15 = arith.constant 0 : index
      %16 = vector.load %arg7[%c0_14, %c0_15] : memref<16x128xf32, #tpu.memory_space<vmem>>, vector<16x128xf32>
      tpu.vector_store %arg7[%c0_14, %c0_15], %15 {strides = array<i32>} : memref<16x128xf32, #tpu.memory_space<vmem>>, vector<16x128xf32>,
    } else {
    }
    %c0 = arith.constant 0 : index
    %c0_1 = arith.constant 0 : index
    %3 = vector.load %arg4[%c0, %c0_1] : memref<128x128xbf16, #tpu.memory_space<vmem>>, vector<128x128xbf16>
    %c0_2 = arith.constant 0 : index
    %c0_3 = arith.constant 0 : index
    %4 = vector.load %arg5[%c0_2, %c0_3] : memref<128x128xbf16, #tpu.memory_space<vmem>>, vector<128x128xbf16>
    %cst = arith.constant dense<0.000000e+00> : vector<128x128xf32>
    %5 = tpu.matmul %3, %4, %cst {dimension_numbers = #tpu.dot_dimension_numbers<[1], [0], [0], [1], [0, 0, 1, 1], [], []>} : vector<128x128xbf16>, vector<128x128xbf16>, vector<128x128xf32> -> vector<128x128xf32>
    %c0_4 = arith.constant 0 : index
    %c0_5 = arith.constant 0 : index
    %6 = vector.load %arg7[%c0_4, %c0_5] : memref<16x128xf32, #tpu.memory_space<vmem>>, vector<16x128xf32>
    %c0_6 = arith.constant 0 : index
    %c0_7 = arith.constant 0 : index
    %7 = vector.load %arg3[%c0_6, %c0_7] : memref<16x128xbf16, #tpu.memory_space<vmem>>, vector<16x128xbf16>
    %8 = arith.truncf %5 : vector<128x128xf32> to vector<128x128xbf16>
    %cst_8 = arith.constant dense<0.000000e+00> : vector<16x128xf32>
    %9 = tpu.matmul %7, %8, %cst_8 {dimension_numbers = #tpu.dot_dimension_numbers<[1], [0], [0], [1], [0, 0, 1, 1], [], []>} : vector<16x128xbf16>, vector<128x128xbf16>, vector<16x128xf32> -> vector<16x128xf32>
    %10 = arith.addf %6, %9 : vector<16x128xf32>
    %c0_9 = arith.constant 0 : index
    %c0_10 = arith.constant 0 : index
    %11 = vector.load %arg7[%c0_9, %c0_10] : memref<16x128xf32, #tpu.memory_space<vmem>>, vector<16x128xf32>
    tpu.vector_store %arg7[%c0_9, %c0_10], %10 {strides = array<i32>} : memref<16x128xf32, #tpu.memory_space<vmem>>, vector<16x128xf32>,
    %c0_i32_11 = arith.constant 0 : i32
    %12 = arith.cmpi eq, %arg2, %c0_i32_11 : i32
    %13 = arith.extui %12 : i1 to i32
    %c0_i32_12 = arith.constant 0 : i32
    %14 = arith.cmpi ne, %13, %c0_i32_12 : i32
    scf.if %14 {
      %c0_13 = arith.constant 0 : index
      %c0_14 = arith.constant 0 : index
      %15 = vector.load %arg7[%c0_13, %c0_14] : memref<16x128xf32, #tpu.memory_space<vmem>>, vector<16x128xf32>
      %16 = arith.truncf %15 : vector<16x128xf32> to vector<16x128xbf16>
      %c0_15 = arith.constant 0 : index
      %c0_16 = arith.constant 0 : index
      %17 = vector.load %arg6[%c0_15, %c0_16] : memref<16x128xbf16, #tpu.memory_space<vmem>>, vector<16x128xbf16>
      tpu.vector_store %arg6[%c0_15, %c0_16], %16 {strides = array<i32>} : memref<16x128xbf16, #tpu.memory_space<vmem>>, vector<16x128xbf16>,
    } else {
    }
    return
  }
  func.func @transform_0(%arg0: i32, %arg1: i32, %arg2: i32) -> (i32, i32) {
    %c0_i32 = arith.constant 0 : i32
    return %arg0, %arg2 : i32, i32
  }
  func.func @transform_1(%arg0: i32, %arg1: i32, %arg2: i32) -> (i32, i32) {
    %c0_i32 = arith.constant 0 : i32
    %c0_i32_0 = arith.constant 0 : i32
    return %arg2, %c0_i32 : i32, i32
  }
  func.func @transform_2(%arg0: i32, %arg1: i32, %arg2: i32) -> (i32, i32) {
    %c0_i32 = arith.constant 0 : i32
    %c0_i32_0 = arith.constant 0 : i32
    return %c0_i32, %arg1 : i32, i32
  }
  func.func @transform_3(%arg0: i32, %arg1: i32, %arg2: i32) -> (i32, i32) {
    %c0_i32 = arith.constant 0 : i32
    return %arg0, %arg1 : i32, i32
  }
}

</mosaic_0001>

<llo_original>
// kernel: gcn_forward.2
$region0: #{gcn_forward.2}
  #allocation0 [shape = 'u32[]', space=smem, size = 0x4, offset = 0x4, fixed_abs, tag = 'smem constant byte address 0x4 - core index']
  #allocation1 [shape = 'u32[72,128]{1,0:T(1,128)}', space=vmem, size = 0x9000, scoped, tag = 'internal scratch']
  #allocation2 [shape = 'f32[16,128]{1,0:T(8,128)}', space=vmem, size = 0x2000, scoped, tag = 'scratch operand']
  %s0 = inlined_call_operand.vmem [shape: bf16[128,128], index: 0, kind: input, shape index: {}]
  %s1 = inlined_call_operand.vmem [shape: bf16[128,128], index: 1, kind: input, shape index: {}]
  %s2 = inlined_call_operand.vmem [shape: bf16[128,128], index: 2, kind: input, shape index: {}]
  %s3 = inlined_call_operand.vmem [shape: bf16[128,128], index: 3, kind: output, shape index: {}]
  %s4 = sld [smem:[#allocation0]]
  $region53: #{gcn_forward.2} parent=0
    _
  %s6 = ssub.s32 1, %s4
  %s7 = scalar_select 0, %s6, %s4
  loop: start=0, step=1, limit=10
  $region2: #{gcn_forward.2} parent=0 // loop_pre_header
    _
  $region3: #{gcn_forward.2} parent=0 // loop_header
    %s9 = sphi 0, %s13
    %p10 = scmp.ge.s32.totalorder %s9, 10
    %s16 = sphi 0, %s35
    %s17 = sphi 0, %s31
    %s18 = sphi 0, %s27
    %s19 = sphi 0, %s16
    %s20 = sphi 0, %s17
    %s21 = sphi 0, %s18
    %s22 = sphi 0, %s19
    %s23 = sphi 0, %s20
    %s24 = sphi 0, %s21
    %s40 = sphi 0, %s42
    %s43 = sphi 0, %s40
    %s44 = sphi 0, %s43
    %s60 = sphi 0, %s44
    %s66 = sphi 0, %s68
    %s69 = sphi 0, %s66
    %s70 = sphi 0, %s69
    %s86 = sphi 0, %s70
    %s92 = sphi 0, %s94
    %s95 = sphi 0, %s92
    %s96 = sphi 0, %s95
    %s112 = sphi 0, %s96
    %s120 = sphi 0, %s122
    %s123 = sphi 0, %s120
    %s124 = sphi 0, %s123
    %s140 = sphi 0, %s124
  $region4: #{gcn_forward.2} parent=0 // loop_header_branch
    %12 = sbr.rel (%p10) target = $region8
  $region5: #{gcn_forward.2} parent=0 // loop_body
    %s14 = ssub.s32 %s9, 1
    %s15 = ssub.s32 %s9, 2
    %s25 = sadd.s32 1, %s18
    %p26 = scmp.ge.s32.totalorder %s25, 1
    %s27 = scalar_select %p26, 0, %s25
    %s28 = sadd.s32 1, %s17
    %s29 = scalar_select %p26, %s28, %s17
    %p30 = scmp.ge.s32.totalorder %s29, 1
    %s31 = scalar_select %p30, 0, %s29
    %s32 = sadd.s32 1, %s16
    %s33 = scalar_select %p30, %s32, %s16
    %p34 = scmp.ge.s32.totalorder %s33, 8
    %s35 = scalar_select %p34, 0, %s33
    %s36 = ssub.s32 %s16, %s35
    %s37 = ssub.s32 %s18, %s27
    %s38 = sor.u32 %s36, %s37
    %p39 = scmp.eq.s32.totalorder %s38, 0
    %s41 = sadd.s32 %s40, 1
    %s42 = scalar_select %p39, %s40, %s41
    %p45 = pneg %p39
    %p46 = scmp.eq.s32.totalorder %s9, 7
    %p47 = por %p45, %p46
    %p48 = scmp.ne.s32.totalorder %s40, %s43
    %p49 = scmp.eq.s32.totalorder %s9, 0
    %p50 = por %p48, %p49
    %p51 = scmp.ne.s32.totalorder %s40, %s43
    %p52 = scmp.eq.s32.totalorder %s14, 7
    %p53 = por %p51, %p52
    %p54 = scmp.ne.s32.totalorder %s43, %s44
    %p55 = scmp.eq.s32.totalorder %s14, 0
    %p56 = por %p54, %p55
    %p57 = scmp.ne.s32.totalorder %s43, %s44
    %p58 = scmp.eq.s32.totalorder %s15, 7
    %p59 = por %p57, %p58
    %p61 = scmp.ne.s32.totalorder %s44, %s60
    %p62 = scmp.eq.s32.totalorder %s15, 0
    %p63 = por %p61, %p62
    %s64 = ssub.s32 %s18, %s27
    %p65 = scmp.eq.s32.totalorder %s64, 0
    %s67 = sadd.s32 %s66, 1
    %s68 = scalar_select %p65, %s66, %s67
    %p71 = pneg %p65
    %p72 = scmp.eq.s32.totalorder %s9, 7
    %p73 = por %p71, %p72
    %p74 = scmp.ne.s32.totalorder %s66, %s69
    %p75 = scmp.eq.s32.totalorder %s9, 0
    %p76 = por %p74, %p75
    %p77 = scmp.ne.s32.totalorder %s66, %s69
    %p78 = scmp.eq.s32.totalorder %s14, 7
    %p79 = por %p77, %p78
    %p80 = scmp.ne.s32.totalorder %s69, %s70
    %p81 = scmp.eq.s32.totalorder %s14, 0
    %p82 = por %p80, %p81
    %p83 = scmp.ne.s32.totalorder %s69, %s70
    %p84 = scmp.eq.s32.totalorder %s15, 7
    %p85 = por %p83, %p84
    %p87 = scmp.ne.s32.totalorder %s70, %s86
    %p88 = scmp.eq.s32.totalorder %s15, 0
    %p89 = por %p87, %p88
    %s90 = ssub.s32 %s17, %s31
    %p91 = scmp.eq.s32.totalorder %s90, 0
    %s93 = sadd.s32 %s92, 1
    %s94 = scalar_select %p91, %s92, %s93
    %p97 = pneg %p91
    %p98 = scmp.eq.s32.totalorder %s9, 7
    %p99 = por %p97, %p98
    %p100 = scmp.ne.s32.totalorder %s92, %s95
    %p101 = scmp.eq.s32.totalorder %s9, 0
    %p102 = por %p100, %p101
    %p103 = scmp.ne.s32.totalorder %s92, %s95
    %p104 = scmp.eq.s32.totalorder %s14, 7
    %p105 = por %p103, %p104
    %p106 = scmp.ne.s32.totalorder %s95, %s96
    %p107 = scmp.eq.s32.totalorder %s14, 0
    %p108 = por %p106, %p107
    %p109 = scmp.ne.s32.totalorder %s95, %s96
    %p110 = scmp.eq.s32.totalorder %s15, 7
    %p111 = por %p109, %p110
    %p113 = scmp.ne.s32.totalorder %s96, %s112
    %p114 = scmp.eq.s32.totalorder %s15, 0
    %p115 = por %p113, %p114
    %s116 = ssub.s32 %s16, %s35
    %s117 = ssub.s32 %s17, %s31
    %s118 = sor.u32 %s116, %s117
    %p119 = scmp.eq.s32.totalorder %s118, 0
    %s121 = sadd.s32 %s120, 1
    %s122 = scalar_select %p119, %s120, %s121
    %p125 = pneg %p119
    %p126 = scmp.eq.s32.totalorder %s9, 7
    %p127 = por %p125, %p126
    %p128 = scmp.ne.s32.totalorder %s120, %s123
    %p129 = scmp.eq.s32.totalorder %s9, 0
    %p130 = por %p128, %p129
    %p131 = scmp.ne.s32.totalorder %s120, %s123
    %p132 = scmp.eq.s32.totalorder %s14, 7
    %p133 = por %p131, %p132
    %p134 = scmp.ne.s32.totalorder %s123, %s124
    %p135 = scmp.eq.s32.totalorder %s14, 0
    %p136 = por %p134, %p135
    %p137 = scmp.ne.s32.totalorder %s123, %s124
    %p138 = scmp.eq.s32.totalorder %s15, 7
    %p139 = por %p137, %p138
    %p141 = scmp.ne.s32.totalorder %s124, %s140
    %p142 = scmp.eq.s32.totalorder %s15, 0
    %p143 = por %p141, %p142
    %p144 = scmp.le.s32.totalorder 1, %s9
    %p145 = scmp.lt.s32.totalorder %s9, 9
    %p146 = pnand %p144, %p145
    %p147 = pneg %p146
    // Predicated region
    $region9: #{gcn_forward.2} parent=5 // pred_check
      _
    $region10: #{gcn_forward.2} parent=5 // pred_check_branch
      %149 = sbr.rel (%p146) target = $region12
    $region11: #{gcn_forward.2} parent=5 // pred_region
      %s150 = ssub.s32 %s9, 1
      // Predicated region
      $region13: #{gcn_forward.2} parent=11 // pred_check
        %p151 = pneg %p82
      $region14: #{gcn_forward.2} parent=11 // pred_check_branch
        %153 = sbr.rel (%p151) target = $region16
      $region15: #{gcn_forward.2} parent=11 // pred_region
        %s154 = smul.u32 16, %s21
        %p155 = scmp.lt.s32.totalorder %s154, 15
        %s156 = scalar_select %p155, %s154, 15
        %s157 = smul.addr %s156, 4
        %s158 = scalar_lea.vmem %s1, %s157
        %s159 = smul.u32 16, %s21
      $region16: #{gcn_forward.2} parent=11 // pred_fallthru
        _
      // Predicated region
      $region17: #{gcn_forward.2} parent=11 // pred_check
        %p160 = pneg %p108
      $region18: #{gcn_forward.2} parent=11 // pred_check_branch
        %162 = sbr.rel (%p160) target = $region20
      $region19: #{gcn_forward.2} parent=11 // pred_region
        %p163 = scmp.lt.s32.totalorder %s20, 0
        %s164 = scalar_select %p163, %s20, 0
        %s165 = smul.addr %s164, 4
        %s166 = scalar_lea.vmem %s2, %s165
      $region20: #{gcn_forward.2} parent=11 // pred_fallthru
        _
    $region12: #{gcn_forward.2} parent=5 // pred_fallthru
      _
    %p167 = scmp.lt.s32.totalorder %s9, 8
    // Predicated region
    $region21: #{gcn_forward.2} parent=5 // pred_check
      %p168 = pneg %p167
    $region22: #{gcn_forward.2} parent=5 // pred_check_branch
      %170 = sbr.rel (%p168) target = $region24
    $region23: #{gcn_forward.2} parent=5 // pred_region
      // Predicated region
      $region25: #{gcn_forward.2} parent=23 // pred_check
        %p171 = pneg %p50
      $region26: #{gcn_forward.2} parent=23 // pred_check_branch
        %173 = sbr.rel (%p171) target = $region28
      $region27: #{gcn_forward.2} parent=23 // pred_region
        %s174 = smul.u32 2, %s16
        %p175 = scmp.lt.s32.totalorder %s174, 15
        %s176 = scalar_select %p175, %s174, 15
        %p177 = scmp.lt.s32.totalorder %s18, 0
        %s178 = scalar_select %p177, %s18, 0
        %s179 = sadd.s32 %s178, %s176
        %s180 = smul.addr %s179, 4
        %s181 = scalar_lea.vmem %s0, %s180
        %s182 = smul.u32 2, %s16
      $region28: #{gcn_forward.2} parent=23 // pred_fallthru
        _
    $region24: #{gcn_forward.2} parent=5 // pred_fallthru
      _
    %p183 = scmp.le.s32.totalorder 1, %s9
    %p184 = scmp.lt.s32.totalorder %s9, 9
    %p185 = pnand %p183, %p184
    %p186 = pneg %p185
    // Predicated region
    $region29: #{gcn_forward.2} parent=5 // pred_check
      _
    $region30: #{gcn_forward.2} parent=5 // pred_check_branch
      %188 = sbr.rel (%p185) target = $region32
    $region31: #{gcn_forward.2} parent=5 // pred_region
      %s189 = ssub.s32 %s9, 1
      %s190 = smul.u32 2, %s19
      %p191 = scmp.lt.s32.totalorder %s190, 15
      %s192 = scalar_select %p191, %s190, 15
      %p193 = scmp.lt.s32.totalorder %s21, 0
      %s194 = scalar_select %p193, %s21, 0
      %s195 = sadd.s32 %s194, %s192
      %s196 = smul.addr %s195, 4
      %s197 = scalar_lea.vmem %s0, %s196
      %p198 = pneg %p56
      %p199 = pneg %p53
      %s200 = smul.u32 16, %s21
      %p201 = scmp.lt.s32.totalorder %s200, 15
      %s202 = scalar_select %p201, %s200, 15
      %s203 = smul.addr %s202, 4
      %s204 = scalar_lea.vmem %s1, %s203
      %p205 = pneg %p82
      %p206 = pneg %p79
      %p207 = scmp.lt.s32.totalorder %s20, 0
      %s208 = scalar_select %p207, %s20, 0
      %s209 = smul.addr %s208, 4
      %s210 = scalar_lea.vmem %s2, %s209
      %p211 = pneg %p108
      %p212 = pneg %p105
      %p213 = pneg %p136
      %p214 = pneg %p133
      %s215 = smul.u32 2, %s19
      %p216 = scmp.lt.s32.totalorder %s215, 15
      %s217 = scalar_select %p216, %s215, 15
      %p218 = scmp.lt.s32.totalorder %s20, 0
      %s219 = scalar_select %p218, %s20, 0
      %s220 = sadd.s32 %s219, %s217
      %s221 = smul.addr %s220, 4
      %s222 = scalar_lea.vmem %s3, %s221
      %s223 = smul.u32 2, %s19
      %p224 = scmp.lt.s32.totalorder %s223, 15
      %s225 = scalar_select %p224, %s223, 15
      %p226 = scmp.lt.s32.totalorder %s21, 0
      %s227 = scalar_select %p226, %s21, 0
      %s228 = sadd.s32 %s227, %s225
      %s229 = smul.addr %s228, 4
      %s230 = scalar_lea.vmem %s0, %s229
      %s231 = smul.u32 2, %s19
      %s232 = smul.u32 16, %s21
      %p233 = scmp.lt.s32.totalorder %s232, 15
      %s234 = scalar_select %p233, %s232, 15
      %s235 = smul.addr %s234, 4
      %s236 = scalar_lea.vmem %s1, %s235
      %s237 = smul.u32 16, %s21
      %p238 = scmp.lt.s32.totalorder %s20, 0
      %s239 = scalar_select %p238, %s20, 0
      %s240 = smul.addr %s239, 4
      %s241 = scalar_lea.vmem %s2, %s240
      %s242 = smul.u32 2, %s19
      %p243 = scmp.lt.s32.totalorder %s242, 15
      %s244 = scalar_select %p243, %s242, 15
      %p245 = scmp.lt.s32.totalorder %s20, 0
      %s246 = scalar_select %p245, %s20, 0
      %s247 = sadd.s32 %s246, %s244
      %s248 = smul.addr %s247, 4
      %s249 = scalar_lea.vmem %s3, %s248
      %s250 = smul.u32 2, %s19
      %p251 = scmp.eq.s32.totalorder %s21, 0
      // Predicated region
      $region33: #{gcn_forward.2} parent=31 // pred_check
        %p252 = pneg %p251
      $region34: #{gcn_forward.2} parent=31 // pred_check_branch
        %254 = sbr.rel (%p252) target = $region36
      $region35: #{gcn_forward.2} parent=31 // pred_region
        %255 = vst [vmem:[#allocation2] sm:$0xff] 0.0
        %256 = vst [vmem:[#allocation2 + $0x8] sm:$0xff] 0.0
      $region36: #{gcn_forward.2} parent=31 // pred_fallthru
        _
      %v257 = vld [vmem:[%s236] sm:$0xf]
      %v258 = vld [vmem:[%s236 + $0x4] sm:$0xf]
      %v259 = vld [vmem:[%s236 + $0x8] sm:$0xf]
      %v260 = vld [vmem:[%s236 + $0xc] sm:$0xf]
      %v261 = vld [vmem:[%s236 + $0x10] sm:$0xf]
      %v262 = vld [vmem:[%s236 + $0x14] sm:$0xf]
      %v263 = vld [vmem:[%s236 + $0x18] sm:$0xf]
      %v264 = vld [vmem:[%s236 + $0x1c] sm:$0xf]
      %v265 = vld [vmem:[%s236 + $0x20] sm:$0xf]
      %v266 = vld [vmem:[%s236 + $0x24] sm:$0xf]
      %v267 = vld [vmem:[%s236 + $0x28] sm:$0xf]
      %v268 = vld [vmem:[%s236 + $0x2c] sm:$0xf]
      %v269 = vld [vmem:[%s236 + $0x30] sm:$0xf]
      %v270 = vld [vmem:[%s236 + $0x34] sm:$0xf]
      %v271 = vld [vmem:[%s236 + $0x38] sm:$0xf]
      %v272 = vld [vmem:[%s236 + $0x3c] sm:$0xf]
      %v273 = vld [vmem:[%s241] sm:$0xf]
      %v274 = vld [vmem:[%s241 + $0x4] sm:$0xf]
      %v275 = vld [vmem:[%s241 + $0x8] sm:$0xf]
      %v276 = vld [vmem:[%s241 + $0xc] sm:$0xf]
      %v277 = vld [vmem:[%s241 + $0x10] sm:$0xf]
      %v278 = vld [vmem:[%s241 + $0x14] sm:$0xf]
      %v279 = vld [vmem:[%s241 + $0x18] sm:$0xf]
      %v280 = vld [vmem:[%s241 + $0x1c] sm:$0xf]
      %v281 = vld [vmem:[%s241 + $0x20] sm:$0xf]
      %v282 = vld [vmem:[%s241 + $0x24] sm:$0xf]
      %v283 = vld [vmem:[%s241 + $0x28] sm:$0xf]
      %v284 = vld [vmem:[%s241 + $0x2c] sm:$0xf]
      %v285 = vld [vmem:[%s241 + $0x30] sm:$0xf]
      %v286 = vld [vmem:[%s241 + $0x34] sm:$0xf]
      %v287 = vld [vmem:[%s241 + $0x38] sm:$0xf]
      %v288 = vld [vmem:[%s241 + $0x3c] sm:$0xf]
      %v305 = vunpack.c.l.b16 %v257
      %v306 = vunpack.c.l.b16 %v258
      %v307 = vunpack.c.l.b16 %v259
      %v308 = vunpack.c.l.b16 %v260
      %v309 = vunpack.c.l.b16 %v261
      %v310 = vunpack.c.l.b16 %v262
      %v311 = vunpack.c.l.b16 %v263
      %v312 = vunpack.c.l.b16 %v264
      %v313 = vunpack.c.l.b16 %v265
      %v314 = vunpack.c.l.b16 %v266
      %v315 = vunpack.c.l.b16 %v267
      %v316 = vunpack.c.l.b16 %v268
      %v317 = vunpack.c.l.b16 %v269
      %v318 = vunpack.c.l.b16 %v270
      %v319 = vunpack.c.l.b16 %v271
      %v320 = vunpack.c.l.b16 %v272
      %v321 = vpack.c.b16 %v306, %v305
      %v322 = vpack.c.b16 %v308, %v307
      %v323 = vpack.c.b16 %v310, %v309
      %v324 = vpack.c.b16 %v312, %v311
      %v325 = vpack.c.b16 %v314, %v313
      %v326 = vpack.c.b16 %v316, %v315
      %v327 = vpack.c.b16 %v318, %v317
      %v328 = vpack.c.b16 %v320, %v319
      %v353 = vunpack.c.l.b16 %v273
      %v354 = vunpack.c.l.b16 %v274
      %v355 = vunpack.c.l.b16 %v275
      %v356 = vunpack.c.l.b16 %v276
      %v357 = vunpack.c.l.b16 %v277
      %v358 = vunpack.c.l.b16 %v278
      %v359 = vunpack.c.l.b16 %v279
      %v360 = vunpack.c.l.b16 %v280
      %v361 = vunpack.c.l.b16 %v281
      %v362 = vunpack.c.l.b16 %v282
      %v363 = vunpack.c.l.b16 %v283
      %v364 = vunpack.c.l.b16 %v284
      %v365 = vunpack.c.l.b16 %v285
      %v366 = vunpack.c.l.b16 %v286
      %v367 = vunpack.c.l.b16 %v287
      %v368 = vunpack.c.l.b16 %v288
      %v369 = vpack.c.b16 %v354, %v353
      %v370 = vpack.c.b16 %v356, %v355
      %v371 = vpack.c.b16 %v358, %v357
      %v372 = vpack.c.b16 %v360, %v359
      %v373 = vpack.c.b16 %v362, %v361
      %v374 = vpack.c.b16 %v364, %v363
      %v375 = vpack.c.b16 %v366, %v365
      %v376 = vpack.c.b16 %v368, %v367
      %385 = vmatpush.bf16.msra.mxu0 %v376
      %386 = vmatpush.bf16.msra.mxu0 %v375
      %387 = vmatpush.bf16.msra.mxu0 %v374
      %388 = vmatpush.bf16.msra.mxu0 %v373
      %389 = vmatpush.bf16.msra.mxu0 %v372
      %390 = vmatpush.bf16.msra.mxu0 %v371
      %391 = vmatpush.bf16.msra.mxu0 %v370
      %392 = vmatpush.bf16.msra.mxu0 %v369
      %393 = vmatmul.bf16.gmra.mxu0 %v321
      %v394 = vpop.f32.mrf.mxu0
      %v395 = vadd.f32 0.0, %v394
      %v396 = vpop.f32.mrf.mxu0
      %v397 = vadd.f32 0.0, %v396
      %398 = vmatmul.bf16.gmra.mxu0 %v322
      %v399 = vpop.f32.mrf.mxu0
      %v400 = vadd.f32 0.0, %v399
      %v401 = vpop.f32.mrf.mxu0
      %v402 = vadd.f32 0.0, %v401
      %403 = vmatmul.bf16.gmra.mxu0 %v323
      %v404 = vpop.f32.mrf.mxu0
      %v405 = vadd.f32 0.0, %v404
      %v406 = vpop.f32.mrf.mxu0
      %v407 = vadd.f32 0.0, %v406
      %408 = vmatmul.bf16.gmra.mxu0 %v324
      %v409 = vpop.f32.mrf.mxu0
      %v410 = vadd.f32 0.0, %v409
      %v411 = vpop.f32.mrf.mxu0
      %v412 = vadd.f32 0.0, %v411
      %413 = vmatmul.bf16.gmra.mxu0 %v325
      %v414 = vpop.f32.mrf.mxu0
      %v415 = vadd.f32 0.0, %v414
      %v416 = vpop.f32.mrf.mxu0
      %v417 = vadd.f32 0.0, %v416
      %418 = vmatmul.bf16.gmra.mxu0 %v326
      %v419 = vpop.f32.mrf.mxu0
      %v420 = vadd.f32 0.0, %v419
      %v421 = vpop.f32.mrf.mxu0
      %v422 = vadd.f32 0.0, %v421
      %423 = vmatmul.bf16.gmra.mxu0 %v327
      %v424 = vpop.f32.mrf.mxu0
      %v425 = vadd.f32 0.0, %v424
      %v426 = vpop.f32.mrf.mxu0
      %v427 = vadd.f32 0.0, %v426
      %428 = vmatmul.bf16.gmra.mxu0 %v328
      %v429 = vpop.f32.mrf.mxu0
      %v430 = vadd.f32 0.0, %v429
      %v431 = vpop.f32.mrf.mxu0
      %v432 = vadd.f32 0.0, %v431
      %433 = vdwg.mxu0
      %v434 = vld [vmem:[#allocation2] sm:$0xff]
      %v435 = vld [vmem:[#allocation2 + $0x8] sm:$0xff]
      %v436 = vld [vmem:[%s230] sm:$0xf]
      %v437 = vld [vmem:[%s230 + $0x4] sm:$0xf]
      %v438 = vpack.c.bf16 %v397, %v395
      %v439 = vpack.c.bf16 %v402, %v400
      %v440 = vpack.c.bf16 %v407, %v405
      %v441 = vpack.c.bf16 %v412, %v410
      %v442 = vpack.c.bf16 %v417, %v415
      %v443 = vpack.c.bf16 %v422, %v420
      %v444 = vpack.c.bf16 %v427, %v425
      %v445 = vpack.c.bf16 %v432, %v430
      %v448 = vunpack.c.l.b16 %v436
      %v449 = vunpack.c.l.b16 %v437
      %v450 = vpack.c.b16 %v449, %v448
      %452 = vmatpush.bf16.msra.mxu0 %v445
      %453 = vmatpush.bf16.msra.mxu0 %v444
      %454 = vmatpush.bf16.msra.mxu0 %v443
      %455 = vmatpush.bf16.msra.mxu0 %v442
      %456 = vmatpush.bf16.msra.mxu0 %v441
      %457 = vmatpush.bf16.msra.mxu0 %v440
      %458 = vmatpush.bf16.msra.mxu0 %v439
      %459 = vmatpush.bf16.msra.mxu0 %v438
      %460 = vmatmul.bf16.gmra.mxu0 %v450
      %v461 = vpop.f32.mrf.mxu0
      %v462 = vadd.f32 0.0, %v461
      %v463 = vpop.f32.mrf.mxu0
      %v464 = vadd.f32 0.0, %v463
      %465 = vdwg.mxu0
      %v466 = vadd.f32 %v434, %v462
      %v467 = vadd.f32 %v435, %v464
      %468 = vst [vmem:[#allocation2] sm:$0xff] %v466
      %469 = vst [vmem:[#allocation2 + $0x8] sm:$0xff] %v467
      // Predicated region
      $region37: #{gcn_forward.2} parent=31 // pred_check
        %p470 = pneg %p251
      $region38: #{gcn_forward.2} parent=31 // pred_check_branch
        %472 = sbr.rel (%p470) target = $region40
      $region39: #{gcn_forward.2} parent=31 // pred_region
        %v473 = vld [vmem:[#allocation2] sm:$0xff]
        %v474 = vld [vmem:[#allocation2 + $0x8] sm:$0xff]
        %v475 = vmax.f32 %v473, 0.0
        %v476 = vmax.f32 %v474, 0.0
        %v477 = vpack.c.bf16 %v475, %v475
        %v478 = vpack.c.bf16 %v476, %v476
        %479 = vst [vmem:[%s249] sm:$0xf] %v477
        %480 = vst [vmem:[%s249 + $0x4] sm:$0xf] %v478
      $region40: #{gcn_forward.2} parent=31 // pred_fallthru
        _
      %s481 = smul.u32 2, %s19
      %p482 = scmp.lt.s32.totalorder %s481, 15
      %s483 = scalar_select %p482, %s481, 15
      %p484 = scmp.lt.s32.totalorder %s20, 0
      %s485 = scalar_select %p484, %s20, 0
      %s486 = sadd.s32 %s485, %s483
      %s487 = smul.addr %s486, 4
      %s488 = scalar_lea.vmem %s3, %s487
      // Predicated region
      $region41: #{gcn_forward.2} parent=31 // pred_check
        %p489 = pneg %p133
      $region42: #{gcn_forward.2} parent=31 // pred_check_branch
        %491 = sbr.rel (%p489) target = $region44
      $region43: #{gcn_forward.2} parent=31 // pred_region
        %s492 = smul.u32 2, %s19
      $region44: #{gcn_forward.2} parent=31 // pred_fallthru
        _
    $region32: #{gcn_forward.2} parent=5 // pred_fallthru
      _
    %p493 = scmp.le.s32.totalorder 2, %s9
    // Predicated region
    $region45: #{gcn_forward.2} parent=5 // pred_check
      %p494 = pneg %p493
    $region46: #{gcn_forward.2} parent=5 // pred_check_branch
      %496 = sbr.rel (%p494) target = $region48
    $region47: #{gcn_forward.2} parent=5 // pred_region
      %s497 = ssub.s32 %s9, 2
      // Predicated region
      $region49: #{gcn_forward.2} parent=47 // pred_check
        %p498 = pneg %p139
      $region50: #{gcn_forward.2} parent=47 // pred_check_branch
        %500 = sbr.rel (%p498) target = $region52
      $region51: #{gcn_forward.2} parent=47 // pred_region
        %s501 = smul.u32 2, %s22
        %p502 = scmp.lt.s32.totalorder %s501, 15
        %s503 = scalar_select %p502, %s501, 15
        %p504 = scmp.lt.s32.totalorder %s23, 0
        %s505 = scalar_select %p504, %s23, 0
        %s506 = sadd.s32 %s505, %s503
        %s507 = smul.addr %s506, 4
        %s508 = scalar_lea.vmem %s3, %s507
      $region52: #{gcn_forward.2} parent=47 // pred_fallthru
        _
    $region48: #{gcn_forward.2} parent=5 // pred_fallthru
      _
  $region6: #{gcn_forward.2} parent=0 // loop_footer
    %s13 = sadd.s32 1, %s9
  $region7: #{gcn_forward.2} parent=0 // loop_footer_branch
    %8 = sbr.rel target = $region3
  $region8: #{gcn_forward.2} parent=0 // loop_exit
    _

// kernel: gcn_forward.3
$region0: #{gcn_forward.3}
  #allocation0 [shape = 'u32[]', space=smem, size = 0x4, offset = 0x4, fixed_abs, tag = 'smem constant byte address 0x4 - core index']
  #allocation1 [shape = 'u32[72,128]{1,0:T(1,128)}', space=vmem, size = 0x9000, scoped, tag = 'internal scratch']
  #allocation2 [shape = 'f32[16,128]{1,0:T(8,128)}', space=vmem, size = 0x2000, scoped, tag = 'scratch operand']
  %s0 = inlined_call_operand.vmem [shape: bf16[128,128], index: 0, kind: input, shape index: {}]
  %s1 = inlined_call_operand.vmem [shape: bf16[128,128], index: 1, kind: input, shape index: {}]
  %s2 = inlined_call_operand.vmem [shape: bf16[128,128], index: 2, kind: input, shape index: {}]
  %s3 = inlined_call_operand.vmem [shape: bf16[128,128], index: 3, kind: output, shape index: {}]
  %s4 = sld [smem:[#allocation0]]
  $region53: #{gcn_forward.3} parent=0
    _
  %s6 = ssub.s32 1, %s4
  %s7 = scalar_select 0, %s6, %s4
  loop: start=0, step=1, limit=10
  $region2: #{gcn_forward.3} parent=0 // loop_pre_header
    _
  $region3: #{gcn_forward.3} parent=0 // loop_header
    %s9 = sphi 0, %s13
    %p10 = scmp.ge.s32.totalorder %s9, 10
    %s16 = sphi 0, %s35
    %s17 = sphi 0, %s31
    %s18 = sphi 0, %s27
    %s19 = sphi 0, %s16
    %s20 = sphi 0, %s17
    %s21 = sphi 0, %s18
    %s22 = sphi 0, %s19
    %s23 = sphi 0, %s20
    %s24 = sphi 0, %s21
    %s40 = sphi 0, %s42
    %s43 = sphi 0, %s40
    %s44 = sphi 0, %s43
    %s60 = sphi 0, %s44
    %s66 = sphi 0, %s68
    %s69 = sphi 0, %s66
    %s70 = sphi 0, %s69
    %s86 = sphi 0, %s70
    %s92 = sphi 0, %s94
    %s95 = sphi 0, %s92
    %s96 = sphi 0, %s95
    %s112 = sphi 0, %s96
    %s120 = sphi 0, %s122
    %s123 = sphi 0, %s120
    %s124 = sphi 0, %s123
    %s140 = sphi 0, %s124
  $region4: #{gcn_forward.3} parent=0 // loop_header_branch
    %12 = sbr.rel (%p10) target = $region8
  $region5: #{gcn_forward.3} parent=0 // loop_body
    %s14 = ssub.s32 %s9, 1
    %s15 = ssub.s32 %s9, 2
    %s25 = sadd.s32 1, %s18
    %p26 = scmp.ge.s32.totalorder %s25, 1
    %s27 = scalar_select %p26, 0, %s25
    %s28 = sadd.s32 1, %s17
    %s29 = scalar_select %p26, %s28, %s17
    %p30 = scmp.ge.s32.totalorder %s29, 1
    %s31 = scalar_select %p30, 0, %s29
    %s32 = sadd.s32 1, %s16
    %s33 = scalar_select %p30, %s32, %s16
    %p34 = scmp.ge.s32.totalorder %s33, 8
    %s35 = scalar_select %p34, 0, %s33
    %s36 = ssub.s32 %s16, %s35
    %s37 = ssub.s32 %s18, %s27
    %s38 = sor.u32 %s36, %s37
    %p39 = scmp.eq.s32.totalorder %s38, 0
    %s41 = sadd.s32 %s40, 1
    %s42 = scalar_select %p39, %s40, %s41
    %p45 = pneg %p39
    %p46 = scmp.eq.s32.totalorder %s9, 7
    %p47 = por %p45, %p46
    %p48 = scmp.ne.s32.totalorder %s40, %s43
    %p49 = scmp.eq.s32.totalorder %s9, 0
    %p50 = por %p48, %p49
    %p51 = scmp.ne.s32.totalorder %s40, %s43
    %p52 = scmp.eq.s32.totalorder %s14, 7
    %p53 = por %p51, %p52
    %p54 = scmp.ne.s32.totalorder %s43, %s44
    %p55 = scmp.eq.s32.totalorder %s14, 0
    %p56 = por %p54, %p55
    %p57 = scmp.ne.s32.totalorder %s43, %s44
    %p58 = scmp.eq.s32.totalorder %s15, 7
    %p59 = por %p57, %p58
    %p61 = scmp.ne.s32.totalorder %s44, %s60
    %p62 = scmp.eq.s32.totalorder %s15, 0
    %p63 = por %p61, %p62
    %s64 = ssub.s32 %s18, %s27
    %p65 = scmp.eq.s32.totalorder %s64, 0
    %s67 = sadd.s32 %s66, 1
    %s68 = scalar_select %p65, %s66, %s67
    %p71 = pneg %p65
    %p72 = scmp.eq.s32.totalorder %s9, 7
    %p73 = por %p71, %p72
    %p74 = scmp.ne.s32.totalorder %s66, %s69
    %p75 = scmp.eq.s32.totalorder %s9, 0
    %p76 = por %p74, %p75
    %p77 = scmp.ne.s32.totalorder %s66, %s69
    %p78 = scmp.eq.s32.totalorder %s14, 7
    %p79 = por %p77, %p78
    %p80 = scmp.ne.s32.totalorder %s69, %s70
    %p81 = scmp.eq.s32.totalorder %s14, 0
    %p82 = por %p80, %p81
    %p83 = scmp.ne.s32.totalorder %s69, %s70
    %p84 = scmp.eq.s32.totalorder %s15, 7
    %p85 = por %p83, %p84
    %p87 = scmp.ne.s32.totalorder %s70, %s86
    %p88 = scmp.eq.s32.totalorder %s15, 0
    %p89 = por %p87, %p88
    %s90 = ssub.s32 %s17, %s31
    %p91 = scmp.eq.s32.totalorder %s90, 0
    %s93 = sadd.s32 %s92, 1
    %s94 = scalar_select %p91, %s92, %s93
    %p97 = pneg %p91
    %p98 = scmp.eq.s32.totalorder %s9, 7
    %p99 = por %p97, %p98
    %p100 = scmp.ne.s32.totalorder %s92, %s95
    %p101 = scmp.eq.s32.totalorder %s9, 0
    %p102 = por %p100, %p101
    %p103 = scmp.ne.s32.totalorder %s92, %s95
    %p104 = scmp.eq.s32.totalorder %s14, 7
    %p105 = por %p103, %p104
    %p106 = scmp.ne.s32.totalorder %s95, %s96
    %p107 = scmp.eq.s32.totalorder %s14, 0
    %p108 = por %p106, %p107
    %p109 = scmp.ne.s32.totalorder %s95, %s96
    %p110 = scmp.eq.s32.totalorder %s15, 7
    %p111 = por %p109, %p110
    %p113 = scmp.ne.s32.totalorder %s96, %s112
    %p114 = scmp.eq.s32.totalorder %s15, 0
    %p115 = por %p113, %p114
    %s116 = ssub.s32 %s16, %s35
    %s117 = ssub.s32 %s17, %s31
    %s118 = sor.u32 %s116, %s117
    %p119 = scmp.eq.s32.totalorder %s118, 0
    %s121 = sadd.s32 %s120, 1
    %s122 = scalar_select %p119, %s120, %s121
    %p125 = pneg %p119
    %p126 = scmp.eq.s32.totalorder %s9, 7
    %p127 = por %p125, %p126
    %p128 = scmp.ne.s32.totalorder %s120, %s123
    %p129 = scmp.eq.s32.totalorder %s9, 0
    %p130 = por %p128, %p129
    %p131 = scmp.ne.s32.totalorder %s120, %s123
    %p132 = scmp.eq.s32.totalorder %s14, 7
    %p133 = por %p131, %p132
    %p134 = scmp.ne.s32.totalorder %s123, %s124
    %p135 = scmp.eq.s32.totalorder %s14, 0
    %p136 = por %p134, %p135
    %p137 = scmp.ne.s32.totalorder %s123, %s124
    %p138 = scmp.eq.s32.totalorder %s15, 7
    %p139 = por %p137, %p138
    %p141 = scmp.ne.s32.totalorder %s124, %s140
    %p142 = scmp.eq.s32.totalorder %s15, 0
    %p143 = por %p141, %p142
    %p144 = scmp.le.s32.totalorder 1, %s9
    %p145 = scmp.lt.s32.totalorder %s9, 9
    %p146 = pnand %p144, %p145
    %p147 = pneg %p146
    // Predicated region
    $region9: #{gcn_forward.3} parent=5 // pred_check
      _
    $region10: #{gcn_forward.3} parent=5 // pred_check_branch
      %149 = sbr.rel (%p146) target = $region12
    $region11: #{gcn_forward.3} parent=5 // pred_region
      %s150 = ssub.s32 %s9, 1
      // Predicated region
      $region13: #{gcn_forward.3} parent=11 // pred_check
        %p151 = pneg %p82
      $region14: #{gcn_forward.3} parent=11 // pred_check_branch
        %153 = sbr.rel (%p151) target = $region16
      $region15: #{gcn_forward.3} parent=11 // pred_region
        %s154 = smul.u32 16, %s21
        %p155 = scmp.lt.s32.totalorder %s154, 15
        %s156 = scalar_select %p155, %s154, 15
        %s157 = smul.addr %s156, 4
        %s158 = scalar_lea.vmem %s1, %s157
        %s159 = smul.u32 16, %s21
      $region16: #{gcn_forward.3} parent=11 // pred_fallthru
        _
      // Predicated region
      $region17: #{gcn_forward.3} parent=11 // pred_check
        %p160 = pneg %p108
      $region18: #{gcn_forward.3} parent=11 // pred_check_branch
        %162 = sbr.rel (%p160) target = $region20
      $region19: #{gcn_forward.3} parent=11 // pred_region
        %p163 = scmp.lt.s32.totalorder %s20, 0
        %s164 = scalar_select %p163, %s20, 0
        %s165 = smul.addr %s164, 4
        %s166 = scalar_lea.vmem %s2, %s165
      $region20: #{gcn_forward.3} parent=11 // pred_fallthru
        _
    $region12: #{gcn_forward.3} parent=5 // pred_fallthru
      _
    %p167 = scmp.lt.s32.totalorder %s9, 8
    // Predicated region
    $region21: #{gcn_forward.3} parent=5 // pred_check
      %p168 = pneg %p167
    $region22: #{gcn_forward.3} parent=5 // pred_check_branch
      %170 = sbr.rel (%p168) target = $region24
    $region23: #{gcn_forward.3} parent=5 // pred_region
      // Predicated region
      $region25: #{gcn_forward.3} parent=23 // pred_check
        %p171 = pneg %p50
      $region26: #{gcn_forward.3} parent=23 // pred_check_branch
        %173 = sbr.rel (%p171) target = $region28
      $region27: #{gcn_forward.3} parent=23 // pred_region
        %s174 = smul.u32 2, %s16
        %p175 = scmp.lt.s32.totalorder %s174, 15
        %s176 = scalar_select %p175, %s174, 15
        %p177 = scmp.lt.s32.totalorder %s18, 0
        %s178 = scalar_select %p177, %s18, 0
        %s179 = sadd.s32 %s178, %s176
        %s180 = smul.addr %s179, 4
        %s181 = scalar_lea.vmem %s0, %s180
        %s182 = smul.u32 2, %s16
      $region28: #{gcn_forward.3} parent=23 // pred_fallthru
        _
    $region24: #{gcn_forward.3} parent=5 // pred_fallthru
      _
    %p183 = scmp.le.s32.totalorder 1, %s9
    %p184 = scmp.lt.s32.totalorder %s9, 9
    %p185 = pnand %p183, %p184
    %p186 = pneg %p185
    // Predicated region
    $region29: #{gcn_forward.3} parent=5 // pred_check
      _
    $region30: #{gcn_forward.3} parent=5 // pred_check_branch
      %188 = sbr.rel (%p185) target = $region32
    $region31: #{gcn_forward.3} parent=5 // pred_region
      %s189 = ssub.s32 %s9, 1
      %s190 = smul.u32 2, %s19
      %p191 = scmp.lt.s32.totalorder %s190, 15
      %s192 = scalar_select %p191, %s190, 15
      %p193 = scmp.lt.s32.totalorder %s21, 0
      %s194 = scalar_select %p193, %s21, 0
      %s195 = sadd.s32 %s194, %s192
      %s196 = smul.addr %s195, 4
      %s197 = scalar_lea.vmem %s0, %s196
      %p198 = pneg %p56
      %p199 = pneg %p53
      %s200 = smul.u32 16, %s21
      %p201 = scmp.lt.s32.totalorder %s200, 15
      %s202 = scalar_select %p201, %s200, 15
      %s203 = smul.addr %s202, 4
      %s204 = scalar_lea.vmem %s1, %s203
      %p205 = pneg %p82
      %p206 = pneg %p79
      %p207 = scmp.lt.s32.totalorder %s20, 0
      %s208 = scalar_select %p207, %s20, 0
      %s209 = smul.addr %s208, 4
      %s210 = scalar_lea.vmem %s2, %s209
      %p211 = pneg %p108
      %p212 = pneg %p105
      %p213 = pneg %p136
      %p214 = pneg %p133
      %s215 = smul.u32 2, %s19
      %p216 = scmp.lt.s32.totalorder %s215, 15
      %s217 = scalar_select %p216, %s215, 15
      %p218 = scmp.lt.s32.totalorder %s20, 0
      %s219 = scalar_select %p218, %s20, 0
      %s220 = sadd.s32 %s219, %s217
      %s221 = smul.addr %s220, 4
      %s222 = scalar_lea.vmem %s3, %s221
      %s223 = smul.u32 2, %s19
      %p224 = scmp.lt.s32.totalorder %s223, 15
      %s225 = scalar_select %p224, %s223, 15
      %p226 = scmp.lt.s32.totalorder %s21, 0
      %s227 = scalar_select %p226, %s21, 0
      %s228 = sadd.s32 %s227, %s225
      %s229 = smul.addr %s228, 4
      %s230 = scalar_lea.vmem %s0, %s229
      %s231 = smul.u32 2, %s19
      %s232 = smul.u32 16, %s21
      %p233 = scmp.lt.s32.totalorder %s232, 15
      %s234 = scalar_select %p233, %s232, 15
      %s235 = smul.addr %s234, 4
      %s236 = scalar_lea.vmem %s1, %s235
      %s237 = smul.u32 16, %s21
      %p238 = scmp.lt.s32.totalorder %s20, 0
      %s239 = scalar_select %p238, %s20, 0
      %s240 = smul.addr %s239, 4
      %s241 = scalar_lea.vmem %s2, %s240
      %s242 = smul.u32 2, %s19
      %p243 = scmp.lt.s32.totalorder %s242, 15
      %s244 = scalar_select %p243, %s242, 15
      %p245 = scmp.lt.s32.totalorder %s20, 0
      %s246 = scalar_select %p245, %s20, 0
      %s247 = sadd.s32 %s246, %s244
      %s248 = smul.addr %s247, 4
      %s249 = scalar_lea.vmem %s3, %s248
      %s250 = smul.u32 2, %s19
      %p251 = scmp.eq.s32.totalorder %s21, 0
      // Predicated region
      $region33: #{gcn_forward.3} parent=31 // pred_check
        %p252 = pneg %p251
      $region34: #{gcn_forward.3} parent=31 // pred_check_branch
        %254 = sbr.rel (%p252) target = $region36
      $region35: #{gcn_forward.3} parent=31 // pred_region
        %255 = vst [vmem:[#allocation2] sm:$0xff] 0.0
        %256 = vst [vmem:[#allocation2 + $0x8] sm:$0xff] 0.0
      $region36: #{gcn_forward.3} parent=31 // pred_fallthru
        _
      %v257 = vld [vmem:[%s236] sm:$0xf]
      %v258 = vld [vmem:[%s236 + $0x4] sm:$0xf]
      %v259 = vld [vmem:[%s236 + $0x8] sm:$0xf]
      %v260 = vld [vmem:[%s236 + $0xc] sm:$0xf]
      %v261 = vld [vmem:[%s236 + $0x10] sm:$0xf]
      %v262 = vld [vmem:[%s236 + $0x14] sm:$0xf]
      %v263 = vld [vmem:[%s236 + $0x18] sm:$0xf]
      %v264 = vld [vmem:[%s236 + $0x1c] sm:$0xf]
      %v265 = vld [vmem:[%s236 + $0x20] sm:$0xf]
      %v266 = vld [vmem:[%s236 + $0x24] sm:$0xf]
      %v267 = vld [vmem:[%s236 + $0x28] sm:$0xf]
      %v268 = vld [vmem:[%s236 + $0x2c] sm:$0xf]
      %v269 = vld [vmem:[%s236 + $0x30] sm:$0xf]
      %v270 = vld [vmem:[%s236 + $0x34] sm:$0xf]
      %v271 = vld [vmem:[%s236 + $0x38] sm:$0xf]
      %v272 = vld [vmem:[%s236 + $0x3c] sm:$0xf]
      %v273 = vld [vmem:[%s241] sm:$0xf]
      %v274 = vld [vmem:[%s241 + $0x4] sm:$0xf]
      %v275 = vld [vmem:[%s241 + $0x8] sm:$0xf]
      %v276 = vld [vmem:[%s241 + $0xc] sm:$0xf]
      %v277 = vld [vmem:[%s241 + $0x10] sm:$0xf]
      %v278 = vld [vmem:[%s241 + $0x14] sm:$0xf]
      %v279 = vld [vmem:[%s241 + $0x18] sm:$0xf]
      %v280 = vld [vmem:[%s241 + $0x1c] sm:$0xf]
      %v281 = vld [vmem:[%s241 + $0x20] sm:$0xf]
      %v282 = vld [vmem:[%s241 + $0x24] sm:$0xf]
      %v283 = vld [vmem:[%s241 + $0x28] sm:$0xf]
      %v284 = vld [vmem:[%s241 + $0x2c] sm:$0xf]
      %v285 = vld [vmem:[%s241 + $0x30] sm:$0xf]
      %v286 = vld [vmem:[%s241 + $0x34] sm:$0xf]
      %v287 = vld [vmem:[%s241 + $0x38] sm:$0xf]
      %v288 = vld [vmem:[%s241 + $0x3c] sm:$0xf]
      %v305 = vunpack.c.l.b16 %v257
      %v306 = vunpack.c.l.b16 %v258
      %v307 = vunpack.c.l.b16 %v259
      %v308 = vunpack.c.l.b16 %v260
      %v309 = vunpack.c.l.b16 %v261
      %v310 = vunpack.c.l.b16 %v262
      %v311 = vunpack.c.l.b16 %v263
      %v312 = vunpack.c.l.b16 %v264
      %v313 = vunpack.c.l.b16 %v265
      %v314 = vunpack.c.l.b16 %v266
      %v315 = vunpack.c.l.b16 %v267
      %v316 = vunpack.c.l.b16 %v268
      %v317 = vunpack.c.l.b16 %v269
      %v318 = vunpack.c.l.b16 %v270
      %v319 = vunpack.c.l.b16 %v271
      %v320 = vunpack.c.l.b16 %v272
      %v321 = vpack.c.b16 %v306, %v305
      %v322 = vpack.c.b16 %v308, %v307
      %v323 = vpack.c.b16 %v310, %v309
      %v324 = vpack.c.b16 %v312, %v311
      %v325 = vpack.c.b16 %v314, %v313
      %v326 = vpack.c.b16 %v316, %v315
      %v327 = vpack.c.b16 %v318, %v317
      %v328 = vpack.c.b16 %v320, %v319
      %v353 = vunpack.c.l.b16 %v273
      %v354 = vunpack.c.l.b16 %v274
      %v355 = vunpack.c.l.b16 %v275
      %v356 = vunpack.c.l.b16 %v276
      %v357 = vunpack.c.l.b16 %v277
      %v358 = vunpack.c.l.b16 %v278
      %v359 = vunpack.c.l.b16 %v279
      %v360 = vunpack.c.l.b16 %v280
      %v361 = vunpack.c.l.b16 %v281
      %v362 = vunpack.c.l.b16 %v282
      %v363 = vunpack.c.l.b16 %v283
      %v364 = vunpack.c.l.b16 %v284
      %v365 = vunpack.c.l.b16 %v285
      %v366 = vunpack.c.l.b16 %v286
      %v367 = vunpack.c.l.b16 %v287
      %v368 = vunpack.c.l.b16 %v288
      %v369 = vpack.c.b16 %v354, %v353
      %v370 = vpack.c.b16 %v356, %v355
      %v371 = vpack.c.b16 %v358, %v357
      %v372 = vpack.c.b16 %v360, %v359
      %v373 = vpack.c.b16 %v362, %v361
      %v374 = vpack.c.b16 %v364, %v363
      %v375 = vpack.c.b16 %v366, %v365
      %v376 = vpack.c.b16 %v368, %v367
      %385 = vmatpush.bf16.msra.mxu0 %v376
      %386 = vmatpush.bf16.msra.mxu0 %v375
      %387 = vmatpush.bf16.msra.mxu0 %v374
      %388 = vmatpush.bf16.msra.mxu0 %v373
      %389 = vmatpush.bf16.msra.mxu0 %v372
      %390 = vmatpush.bf16.msra.mxu0 %v371
      %391 = vmatpush.bf16.msra.mxu0 %v370
      %392 = vmatpush.bf16.msra.mxu0 %v369
      %393 = vmatmul.bf16.gmra.mxu0 %v321
      %v394 = vpop.f32.mrf.mxu0
      %v395 = vadd.f32 0.0, %v394
      %v396 = vpop.f32.mrf.mxu0
      %v397 = vadd.f32 0.0, %v396
      %398 = vmatmul.bf16.gmra.mxu0 %v322
      %v399 = vpop.f32.mrf.mxu0
      %v400 = vadd.f32 0.0, %v399
      %v401 = vpop.f32.mrf.mxu0
      %v402 = vadd.f32 0.0, %v401
      %403 = vmatmul.bf16.gmra.mxu0 %v323
      %v404 = vpop.f32.mrf.mxu0
      %v405 = vadd.f32 0.0, %v404
      %v406 = vpop.f32.mrf.mxu0
      %v407 = vadd.f32 0.0, %v406
      %408 = vmatmul.bf16.gmra.mxu0 %v324
      %v409 = vpop.f32.mrf.mxu0
      %v410 = vadd.f32 0.0, %v409
      %v411 = vpop.f32.mrf.mxu0
      %v412 = vadd.f32 0.0, %v411
      %413 = vmatmul.bf16.gmra.mxu0 %v325
      %v414 = vpop.f32.mrf.mxu0
      %v415 = vadd.f32 0.0, %v414
      %v416 = vpop.f32.mrf.mxu0
      %v417 = vadd.f32 0.0, %v416
      %418 = vmatmul.bf16.gmra.mxu0 %v326
      %v419 = vpop.f32.mrf.mxu0
      %v420 = vadd.f32 0.0, %v419
      %v421 = vpop.f32.mrf.mxu0
      %v422 = vadd.f32 0.0, %v421
      %423 = vmatmul.bf16.gmra.mxu0 %v327
      %v424 = vpop.f32.mrf.mxu0
      %v425 = vadd.f32 0.0, %v424
      %v426 = vpop.f32.mrf.mxu0
      %v427 = vadd.f32 0.0, %v426
      %428 = vmatmul.bf16.gmra.mxu0 %v328
      %v429 = vpop.f32.mrf.mxu0
      %v430 = vadd.f32 0.0, %v429
      %v431 = vpop.f32.mrf.mxu0
      %v432 = vadd.f32 0.0, %v431
      %433 = vdwg.mxu0
      %v434 = vld [vmem:[#allocation2] sm:$0xff]
      %v435 = vld [vmem:[#allocation2 + $0x8] sm:$0xff]
      %v436 = vld [vmem:[%s230] sm:$0xf]
      %v437 = vld [vmem:[%s230 + $0x4] sm:$0xf]
      %v438 = vpack.c.bf16 %v397, %v395
      %v439 = vpack.c.bf16 %v402, %v400
      %v440 = vpack.c.bf16 %v407, %v405
      %v441 = vpack.c.bf16 %v412, %v410
      %v442 = vpack.c.bf16 %v417, %v415
      %v443 = vpack.c.bf16 %v422, %v420
      %v444 = vpack.c.bf16 %v427, %v425
      %v445 = vpack.c.bf16 %v432, %v430
      %v448 = vunpack.c.l.b16 %v436
      %v449 = vunpack.c.l.b16 %v437
      %v450 = vpack.c.b16 %v449, %v448
      %452 = vmatpush.bf16.msra.mxu0 %v445
      %453 = vmatpush.bf16.msra.mxu0 %v444
      %454 = vmatpush.bf16.msra.mxu0 %v443
      %455 = vmatpush.bf16.msra.mxu0 %v442
      %456 = vmatpush.bf16.msra.mxu0 %v441
      %457 = vmatpush.bf16.msra.mxu0 %v440
      %458 = vmatpush.bf16.msra.mxu0 %v439
      %459 = vmatpush.bf16.msra.mxu0 %v438
      %460 = vmatmul.bf16.gmra.mxu0 %v450
      %v461 = vpop.f32.mrf.mxu0
      %v462 = vadd.f32 0.0, %v461
      %v463 = vpop.f32.mrf.mxu0
      %v464 = vadd.f32 0.0, %v463
      %465 = vdwg.mxu0
      %v466 = vadd.f32 %v434, %v462
      %v467 = vadd.f32 %v435, %v464
      %468 = vst [vmem:[#allocation2] sm:$0xff] %v466
      %469 = vst [vmem:[#allocation2 + $0x8] sm:$0xff] %v467
      // Predicated region
      $region37: #{gcn_forward.3} parent=31 // pred_check
        %p470 = pneg %p251
      $region38: #{gcn_forward.3} parent=31 // pred_check_branch
        %472 = sbr.rel (%p470) target = $region40
      $region39: #{gcn_forward.3} parent=31 // pred_region
        %v473 = vld [vmem:[#allocation2] sm:$0xff]
        %v474 = vld [vmem:[#allocation2 + $0x8] sm:$0xff]
        %v475 = vpack.c.bf16 %v473, %v473
        %v476 = vpack.c.bf16 %v474, %v474
        %477 = vst [vmem:[%s249] sm:$0xf] %v475
        %478 = vst [vmem:[%s249 + $0x4] sm:$0xf] %v476
      $region40: #{gcn_forward.3} parent=31 // pred_fallthru
        _
      %s479 = smul.u32 2, %s19
      %p480 = scmp.lt.s32.totalorder %s479, 15
      %s481 = scalar_select %p480, %s479, 15
      %p482 = scmp.lt.s32.totalorder %s20, 0
      %s483 = scalar_select %p482, %s20, 0
      %s484 = sadd.s32 %s483, %s481
      %s485 = smul.addr %s484, 4
      %s486 = scalar_lea.vmem %s3, %s485
      // Predicated region
      $region41: #{gcn_forward.3} parent=31 // pred_check
        %p487 = pneg %p133
      $region42: #{gcn_forward.3} parent=31 // pred_check_branch
        %489 = sbr.rel (%p487) target = $region44
      $region43: #{gcn_forward.3} parent=31 // pred_region
        %s490 = smul.u32 2, %s19
      $region44: #{gcn_forward.3} parent=31 // pred_fallthru
        _
    $region32: #{gcn_forward.3} parent=5 // pred_fallthru
      _
    %p491 = scmp.le.s32.totalorder 2, %s9
    // Predicated region
    $region45: #{gcn_forward.3} parent=5 // pred_check
      %p492 = pneg %p491
    $region46: #{gcn_forward.3} parent=5 // pred_check_branch
      %494 = sbr.rel (%p492) target = $region48
    $region47: #{gcn_forward.3} parent=5 // pred_region
      %s495 = ssub.s32 %s9, 2
      // Predicated region
      $region49: #{gcn_forward.3} parent=47 // pred_check
        %p496 = pneg %p139
      $region50: #{gcn_forward.3} parent=47 // pred_check_branch
        %498 = sbr.rel (%p496) target = $region52
      $region51: #{gcn_forward.3} parent=47 // pred_region
        %s499 = smul.u32 2, %s22
        %p500 = scmp.lt.s32.totalorder %s499, 15
        %s501 = scalar_select %p500, %s499, 15
        %p502 = scmp.lt.s32.totalorder %s23, 0
        %s503 = scalar_select %p502, %s23, 0
        %s504 = sadd.s32 %s503, %s501
        %s505 = smul.addr %s504, 4
        %s506 = scalar_lea.vmem %s3, %s505
      $region52: #{gcn_forward.3} parent=47 // pred_fallthru
        _
    $region48: #{gcn_forward.3} parent=5 // pred_fallthru
      _
  $region6: #{gcn_forward.3} parent=0 // loop_footer
    %s13 = sadd.s32 1, %s9
  $region7: #{gcn_forward.3} parent=0 // loop_footer_branch
    %8 = sbr.rel target = $region3
  $region8: #{gcn_forward.3} parent=0 // loop_exit
    _

</llo_original>
